<compile_context>
chip_gen: v7x
topology: tpu7x:2x2x1
jax: 0.10.0
libtpu: 0.0.40
codegen_flags: <defaults>
</compile_context>

<pallas_src>
import jax
import jax.numpy as jnp
from jax.experimental import pallas as pl
from jax.experimental.pallas import tpu as pltpu


# Gate for the VMEM-resident one-hot design (tables + (B,N) one-hot + outputs).
# Conservative so it stays well inside v7x's 64 MiB physical VMEM.
_VMEM_RESIDENT_BUDGET = 32 << 20


# --------------------------------------------------------------------------
# Path A: small/medium N — tables resident in VMEM, one fused one-hot MXU gather
# --------------------------------------------------------------------------
def _cf_onehot_kernel(idx_ref,       # VMEM (B, 1) int32  (clamped indices)
                      tab_ref,       # VMEM (N, 2H)       [pers | comm] concat
                      w2_ref,        # VMEM (1, 2H) f32   [w | w]
                      b_ref,         # SMEM (1, 1) f32    Linear bias
                      rating_ref,    # VMEM (B, 1) f32
                      pers_out_ref,  # VMEM (B, H)
                      comm_out_ref): # VMEM (B, H)
    B, H = pers_out_ref.shape
    N = tab_ref.shape[0]

    # One-hot gather on the MXU: onehot[r, n] = (n == idx[r]); exact in any dtype.
    iota_n = jax.lax.broadcasted_iota(jnp.int32, (B, N), 1)        # (B, N)
    onehot = (iota_n == idx_ref[...]).astype(tab_ref.dtype)        # (B, N)

    # Single matmul gathers BOTH embeddings; HIGHEST precision keeps the
    # gathered rows bit-accurate f32 (no bf16 truncation of the table operand).
    rows = jnp.dot(onehot, tab_ref[...],
                   preferred_element_type=jnp.float32,
                   precision=jax.lax.Precision.HIGHEST)            # (B, 2H) f32

    pers_out_ref[...] = rows[:, :H].astype(pers_out_ref.dtype)
    comm_out_ref[...] = rows[:, H:].astype(comm_out_ref.dtype)

    # affine_output(p + c) + bias, then sigmoid. Because w2 = [w | w],
    # sum(rows * w2, lanes) == w . (p + c); VPU mul + XLU lane reduce + EUP
    # sigmoid — all in otherwise-idle VLIW slots.
    logits = jnp.sum(rows * w2_ref[...], axis=-1, keepdims=True) + b_ref[0, 0]
    rating_ref[...] = jax.nn.sigmoid(logits)                       # (B, 1)


def _forward_onehot(idx, pers_table, comm_table, w, b, vmem_limit_bytes):
    B = idx.shape[0]
    N, H = pers_table.shape
    tdtype = pers_table.dtype

    # Concatenate tables along H (wrapper side) so the kernel needs ONE matmul.
    # If the tables are static across calls, hoist this concat out of the hot
    # path; at these sizes it is negligible.
    tab = jnp.concatenate([pers_table, comm_table], axis=1)             # (N, 2H)
    w_row = w.reshape(1, H).astype(jnp.float32)
    w2 = jnp.concatenate([w_row, w_row], axis=1)                         # (1, 2H)
    b_smem = b.reshape(1, 1).astype(jnp.float32)

    cost = pl.CostEstimate(
        flops=2 * B * N * 2 * H + 4 * B * H,       # one one-hot matmul + head
        transcendentals=B,                         # sigmoid
        bytes_accessed=tab.size * tab.dtype.itemsize
        + 4 * (2 * B * H + 2 * B + 2 * H + 1),
    )

    return pl.pallas_call(
        _cf_onehot_kernel,
        out_shape=(
            jax.ShapeDtypeStruct((B, 1), jnp.float32),
            jax.ShapeDtypeStruct((B, H), tdtype),
            jax.ShapeDtypeStruct((B, H), tdtype),
        ),
        in_specs=[
            pl.BlockSpec(memory_space=pltpu.MemorySpace.VMEM),   # indices (B,1)
            pl.BlockSpec(memory_space=pltpu.MemorySpace.VMEM),   # table (N,2H)
            pl.BlockSpec(memory_space=pltpu.MemorySpace.VMEM),   # weight (1,2H)
            pl.BlockSpec(memory_space=pltpu.MemorySpace.SMEM),   # bias scalar
        ],
        out_specs=(
            pl.BlockSpec(memory_space=pltpu.MemorySpace.VMEM),
            pl.BlockSpec(memory_space=pltpu.MemorySpace.VMEM),
            pl.BlockSpec(memory_space=pltpu.MemorySpace.VMEM),
        ),
        compiler_params=pltpu.CompilerParams(vmem_limit_bytes=vmem_limit_bytes),
        cost_estimate=cost,
    )(idx.reshape(B, 1), tab, w2, b_smem)


# --------------------------------------------------------------------------
# Path B: large N — tables stay in HBM; per-row async-DMA gather (O(B*H) bytes)
# --------------------------------------------------------------------------
def _cf_gather_kernel(idx_ref,       # SMEM (B,) int32 (clamped indices)
                      pers_hbm,      # ANY  (N, H) personality table (HBM)
                      comm_hbm,      # ANY  (N, H) commonality table (HBM)
                      w_ref,         # VMEM (1, H) f32
                      b_ref,         # SMEM (1, 1) f32
                      rating_ref,    # VMEM (B, 1) f32
                      pers_out_ref,  # VMEM (B, H)
                      comm_out_ref,  # VMEM (B, H)
                      p_rows,        # VMEM scratch (B, H)
                      c_rows,        # VMEM scratch (B, H)
                      sems):         # DMA sems (2, B)
    B, H = pers_out_ref.shape

    def row_copies(r):
        row = idx_ref[r]
        pc = pltpu.make_async_copy(pers_hbm.at[pl.ds(row, 1), :],
                                   p_rows.at[pl.ds(r, 1), :], sems.at[0, r])
        cc = pltpu.make_async_copy(comm_hbm.at[pl.ds(row, 1), :],
                                   c_rows.at[pl.ds(r, 1), :], sems.at[1, r])
        return pc, cc

    # Issue every row DMA first (all overlap), then wait. B is a small static
    # Python int so this unrolls.
    for r in range(B):
        pc, cc = row_copies(r)
        pc.start()
        cc.start()
    for r in range(B):
        pc, cc = row_copies(r)
        pc.wait()
        cc.wait()

    p = p_rows[...].astype(jnp.float32)
    c = c_rows[...].astype(jnp.float32)
    pers_out_ref[...] = p.astype(pers_out_ref.dtype)
    comm_out_ref[...] = c.astype(comm_out_ref.dtype)

    logits = jnp.sum((p + c) * w_ref[...], axis=-1, keepdims=True) + b_ref[0, 0]
    rating_ref[...] = jax.nn.sigmoid(logits)


def _forward_gather(idx, pers_table, comm_table, w, b, vmem_limit_bytes):
    B = idx.shape[0]
    N, H = pers_table.shape
    tdtype = pers_table.dtype

    w_row = w.reshape(1, H).astype(jnp.float32)
    b_smem = b.reshape(1, 1).astype(jnp.float32)

    cost = pl.CostEstimate(
        flops=4 * B * H,
        transcendentals=B,
        bytes_accessed=2 * B * H * pers_table.dtype.itemsize
        + 4 * (2 * B * H + 2 * B + H + 1),
    )

    return pl.pallas_call(
        _cf_gather_kernel,
        out_shape=(
            jax.ShapeDtypeStruct((B, 1), jnp.float32),
            jax.ShapeDtypeStruct((B, H), tdtype),
            jax.ShapeDtypeStruct((B, H), tdtype),
        ),
        in_specs=[
            pl.BlockSpec(memory_space=pltpu.MemorySpace.SMEM),   # indices (B,)
            pl.BlockSpec(memory_space=pl.ANY),                   # pers table, HBM
            pl.BlockSpec(memory_space=pl.ANY),                   # comm table, HBM
            pl.BlockSpec(memory_space=pltpu.MemorySpace.VMEM),   # weight (1,H)
            pl.BlockSpec(memory_space=pltpu.MemorySpace.SMEM),   # bias scalar
        ],
        out_specs=(
            pl.BlockSpec(memory_space=pltpu.MemorySpace.VMEM),
            pl.BlockSpec(memory_space=pltpu.MemorySpace.VMEM),
            pl.BlockSpec(memory_space=pltpu.MemorySpace.VMEM),
        ),
        scratch_shapes=[
            pltpu.VMEM((B, H), tdtype),
            pltpu.VMEM((B, H), tdtype),
            pltpu.SemaphoreType.DMA((2, B)),
        ],
        compiler_params=pltpu.CompilerParams(vmem_limit_bytes=vmem_limit_bytes),
        cost_estimate=cost,
    )(idx, pers_table, comm_table, w_row, b_smem)


# --------------------------------------------------------------------------
# Dispatcher
# --------------------------------------------------------------------------
def collaborative_filter_forward(item_indices, pers_table, comm_table, w, b,
                                 *, force_gather=False):
    """Pallas forward. Returns (rating, item_personality, item_commonality)."""
    B = item_indices.shape[0]
    N, H = pers_table.shape

    # Clamp indices (PyTorch's Embedding raises on OOB; Pallas has no bounds
    # check — OOB values map to row N-1 here).
    idx = jnp.clip(item_indices.astype(jnp.int32), 0, N - 1)

    itemsize = pers_table.dtype.itemsize
    table_bytes = 2 * N * H * itemsize           # concatenated table, resident
    onehot_bytes = B * N * 4                     # (B, N) one-hot intermediate
    resident_bytes = table_bytes + onehot_bytes + 4 * (2 * B * H + 2 * B + 2 * H)

    if force_gather or resident_bytes > _VMEM_RESIDENT_BUDGET:
        # Large-N path: O(B*H) bytes of DMA instead of O(N*H); no one-hot.
        return _forward_gather(idx, pers_table, comm_table, w, b,
                               vmem_limit_bytes=32 << 20)

    # Small-N path: explicit scoped-VMEM budget (v5e default is ~16 MiB even
    # though the chip has 128 MiB; v7x only has 64 MiB physical).
    vmem_limit = int(min(48 << 20, max(32 << 20, 2 * resident_bytes)))
    return _forward_onehot(idx, pers_table, comm_table, w, b,
                           vmem_limit_bytes=vmem_limit)


def _reference_forward(item_indices, pers_table, comm_table, w, b):
    p = pers_table[item_indices]                 # (B, H)
    c = comm_table[item_indices]                 # (B, H)
    logits = (p + c) @ w.reshape(-1, 1) + b      # (B, 1)
    return jax.nn.sigmoid(logits), p, c


if __name__ == "__main__":
    # args = {'num_items': 64, 'item_hidden_dim': 128}
    num_items = 64
    item_hidden_dim = 128
    batch = 8

    key = jax.random.PRNGKey(0)
    k1, k2, k3, k4, k5 = jax.random.split(key, 5)

    pers_table = jax.random.normal(k1, (num_items, item_hidden_dim), jnp.float32)
    comm_table = jax.random.normal(k2, (num_items, item_hidden_dim), jnp.float32)
    w = jax.random.normal(k3, (1, item_hidden_dim), jnp.float32) * 0.1  # Linear weight
    b = jax.random.normal(k4, (1,), jnp.float32) * 0.1                  # Linear bias
    item_indices = jax.random.randint(k5, (batch,), 0, num_items, jnp.int32)

    r_ref, p_ref, c_ref = _reference_forward(
        item_indices, pers_table, comm_table, w, b)

    # Path A: VMEM-resident, fused one-hot MXU gather (used at these sizes).
    rating, pers, comm = collaborative_filter_forward(
        item_indices, pers_table, comm_table, w, b)
    jax.block_until_ready((rating, pers, comm))
    assert rating.shape == (batch, 1)
    assert pers.shape == (batch, item_hidden_dim)
    assert comm.shape == (batch, item_hidden_dim)
    assert jnp.allclose(rating, r_ref, atol=1e-5)
    assert jnp.allclose(pers, p_ref, atol=1e-5)
    assert jnp.allclose(comm, c_ref, atol=1e-5)

    # Path B: HBM row-gather (the large-num_items path), forced here to verify
    # it also compiles/runs and matches exactly.
    rating_g, pers_g, comm_g = collaborative_filter_forward(
        item_indices, pers_table, comm_table, w, b, force_gather=True)
    jax.block_until_ready((rating_g, pers_g, comm_g))
    assert jnp.allclose(rating_g, r_ref, atol=1e-5)
    assert jnp.allclose(pers_g, p_ref, atol=1e-5)
    assert jnp.allclose(comm_g, c_ref, atol=1e-5)

    print("KERNEL_OK")
</pallas_src>

<mosaic_0001>
module attributes {stable_mosaic.version = 11 : i64} {
  func.func @_cf_onehot_kernel(%arg0: memref<8x1xi32, #tpu.memory_space<vmem>>, %arg1: memref<64x256xf32, #tpu.memory_space<vmem>>, %arg2: memref<1x256xf32, #tpu.memory_space<vmem>>, %arg3: memref<1x1xf32, #tpu.memory_space<smem>>, %arg4: memref<8x1xf32, #tpu.memory_space<vmem>>, %arg5: memref<8x128xf32, #tpu.memory_space<vmem>>, %arg6: memref<8x128xf32, #tpu.memory_space<vmem>>) attributes {dimension_semantics = [], scalar_prefetch = 0 : i64, scratch_operands = 0 : i64, tpu.core_type = #tpu.core_type<tc>} {
    %0 = tpu.iota {dimensions = array<i32: 1>} : vector<8x64xi32>
    %c0 = arith.constant 0 : index
    %c0_0 = arith.constant 0 : index
    %1 = vector.load %arg0[%c0, %c0_0] : memref<8x1xi32, #tpu.memory_space<vmem>>, vector<8x1xi32>
    %2 = vector.broadcast %1 : vector<8x1xi32> to vector<8x64xi32>
    %3 = arith.cmpi eq, %0, %2 : vector<8x64xi32>
    %4 = arith.extui %3 : vector<8x64xi1> to vector<8x64xi32>
    %5 = arith.sitofp %4 : vector<8x64xi32> to vector<8x64xf32>
    %c0_1 = arith.constant 0 : index
    %c0_2 = arith.constant 0 : index
    %6 = vector.load %arg1[%c0_1, %c0_2] : memref<64x256xf32, #tpu.memory_space<vmem>>, vector<64x256xf32>
    %cst = arith.constant dense<0.000000e+00> : vector<8x256xf32>
    %7 = tpu.matmul %5, %6, %cst {dimension_numbers = #tpu.dot_dimension_numbers<[1], [0], [0], [1], [0, 0, 1, 1], [], []>, precision = #tpu.contract_precision<fp32>} : vector<8x64xf32>, vector<64x256xf32>, vector<8x256xf32> -> vector<8x256xf32>
    %8 = vector.extract_strided_slice %7 {offsets = [0, 0], sizes = [8, 128], strides = [1, 1]} : vector<8x256xf32> to vector<8x128xf32>
    %c0_3 = arith.constant 0 : index
    %c0_4 = arith.constant 0 : index
    %9 = vector.load %arg5[%c0_3, %c0_4] : memref<8x128xf32, #tpu.memory_space<vmem>>, vector<8x128xf32>
    tpu.vector_store %arg5[%c0_3, %c0_4], %8 {strides = array<i32>} : memref<8x128xf32, #tpu.memory_space<vmem>>, vector<8x128xf32>,
    %10 = vector.extract_strided_slice %7 {offsets = [0, 128], sizes = [8, 128], strides = [1, 1]} : vector<8x256xf32> to vector<8x128xf32>
    %c0_5 = arith.constant 0 : index
    %c0_6 = arith.constant 0 : index
    %11 = vector.load %arg6[%c0_5, %c0_6] : memref<8x128xf32, #tpu.memory_space<vmem>>, vector<8x128xf32>
    tpu.vector_store %arg6[%c0_5, %c0_6], %10 {strides = array<i32>} : memref<8x128xf32, #tpu.memory_space<vmem>>, vector<8x128xf32>,
    %c0_7 = arith.constant 0 : index
    %c0_8 = arith.constant 0 : index
    %12 = vector.load %arg2[%c0_7, %c0_8] : memref<1x256xf32, #tpu.memory_space<vmem>>, vector<1x256xf32>
    %13 = vector.broadcast %12 : vector<1x256xf32> to vector<8x256xf32>
    %14 = arith.mulf %7, %13 : vector<8x256xf32>
    %cst_9 = arith.constant dense<0.000000e+00> : vector<8xf32>
    %15 = vector.multi_reduction <add>, %14, %cst_9 [1] : vector<8x256xf32> to vector<8xf32>
    %16 = vector.shape_cast %15 : vector<8xf32> to vector<8x1xf32>
    %c0_10 = arith.constant 0 : index
    %c0_11 = arith.constant 0 : index
    %17 = memref.load %arg3[%c0_10, %c0_11] : memref<1x1xf32, #tpu.memory_space<smem>>
    %18 = vector.broadcast %17 : f32 to vector<8x1xf32>
    %19 = arith.addf %16, %18 : vector<8x1xf32>
    %20 = arith.negf %19 : vector<8x1xf32>
    %21 = math.exp %20 : vector<8x1xf32>
    %cst_12 = arith.constant 1.000000e+00 : f32
    %22 = vector.broadcast %cst_12 : f32 to vector<8x1xf32>
    %23 = arith.addf %22, %21 : vector<8x1xf32>
    %24 = arith.divf %22, %23 : vector<8x1xf32>
    %c0_13 = arith.constant 0 : index
    %c0_14 = arith.constant 0 : index
    %25 = vector.load %arg4[%c0_13, %c0_14] : memref<8x1xf32, #tpu.memory_space<vmem>>, vector<8x1xf32>
    tpu.vector_store %arg4[%c0_13, %c0_14], %24 {strides = array<i32>} : memref<8x1xf32, #tpu.memory_space<vmem>>, vector<8x1xf32>,
    return
  }
}

</mosaic_0001>

<llo_original>
// kernel: tpu_custom_call.1
$region0: #{tpu_custom_call.1}
  #allocation0 [shape = 'u32[]', space=smem, size = 0x4, offset = 0x4, fixed_abs, tag = 'smem constant byte address 0x4 - core index']
  #allocation1 [shape = 'u32[144,128]{1,0:T(1,128)}', space=vmem, size = 0x12000, scoped, tag = 'internal scratch']
  #allocation2 [shape = 'f32[1,1]{1,0:T(1,128)S(6)}', space=smem, size = 0x200, scoped, tag = 'scoped memory for tpu_custom_call.1']
  %s0 = inlined_call_operand.vmem [shape: s32[8,1], index: 0, kind: input, shape index: {}]
  %s1 = inlined_call_operand.hbm [shape: f32[64,256], index: 1, kind: input, shape index: {}]
  %s2 = inlined_call_operand.vmem [shape: f32[1,256], index: 2, kind: input, shape index: {}]
  %s3 = inlined_call_operand.<no memory space> [shape: f32[1,1], index: 3, kind: input, shape index: {}]
  %s4 = inlined_call_operand.vmem [shape: f32[8,1], index: 4, kind: output, shape index: {0}]
  %s5 = inlined_call_operand.hbm [shape: f32[8,128], index: 5, kind: output, shape index: {1}]
  %s6 = inlined_call_operand.hbm [shape: f32[8,128], index: 6, kind: output, shape index: {2}]
  %7 = xla_tuple %s4, %s5, %s6
  %s8 = sld [smem:[#allocation0]]
  $region46: #{tpu_custom_call.1} parent=0
    _
  %s10 = ssub.s32 1, %s8
  %s11 = scalar_select 0, %s10, %s8
  %12 = sst [smem:[#allocation2]] %s3
  $region1: #{tpu_custom_call.1} parent=0
    #allocation3 [shape = 'u8[65536]{0}', space=vmem, size = 0x10000, scoped, tag = 'input window, operand 1, single buffered']
    #allocation4 [shape = 's32[1]{0}', space=sflag, size = 0x4, scoped, tag = 'scoped memory for tpu_custom_call.1']
    #allocation5 [shape = 's32[1]{0}', space=sflag, size = 0x4, scoped, tag = 'scoped memory for tpu_custom_call.1']
    #allocation6 [shape = 'u8[4096]{0}', space=vmem, size = 0x1000, scoped, tag = 'output window, operand 1, single buffered']
    #allocation7 [shape = 'u8[4096]{0}', space=vmem, size = 0x1000, scoped, tag = 'output window, operand 2, single buffered']
    #allocation8 [shape = 's32[1]{0}', space=sflag, size = 0x4, scoped, tag = 'scoped memory for tpu_custom_call.1']
    %13 = vsyncpa [#allocation4], 0
    %14 = vsyncpa [#allocation5], 0
    %15 = vsyncpa [#allocation8], 0
    // Predicated region
    $region2: #{tpu_custom_call.1} parent=1 // pred_check
      _
    $region3: #{tpu_custom_call.1} parent=1 // pred_check_branch
      %17 = sbr.rel (0) target = $region5
    $region4: #{tpu_custom_call.1} parent=1 // pred_region
      _
    $region5: #{tpu_custom_call.1} parent=1 // pred_fallthru
      _
    // Predicated region
    $region6: #{tpu_custom_call.1} parent=1 // pred_check
      _
    $region7: #{tpu_custom_call.1} parent=1 // pred_check_branch
      %19 = sbr.rel (0) target = $region9
    $region8: #{tpu_custom_call.1} parent=1 // pred_region
      %s21 = ssub.s32 2048, 2048
      %22 = vsyncadd [#allocation4], %s21
      %s23 = sshll.u32 [#allocation3], 4
      %s24 = int_to_ptr.vmem [resolvable:$true] %s23
      %29 = dma.hbm_to_vmem [thread:$0]  %s1, 2048, %s24, [#allocation4], 256, 256, 16
    $region9: #{tpu_custom_call.1} parent=1 // pred_fallthru
      _
    // Predicated region
    $region10: #{tpu_custom_call.1} parent=1 // pred_check
      _
    $region11: #{tpu_custom_call.1} parent=1 // pred_check_branch
      %31 = sbr.rel (0) target = $region13
    $region12: #{tpu_custom_call.1} parent=1 // pred_region
      _
    $region13: #{tpu_custom_call.1} parent=1 // pred_fallthru
      _
    // Predicated region
    $region14: #{tpu_custom_call.1} parent=1 // pred_check
      _
    $region15: #{tpu_custom_call.1} parent=1 // pred_check_branch
      %33 = sbr.rel (0) target = $region17
    $region16: #{tpu_custom_call.1} parent=1 // pred_region
      _
    $region17: #{tpu_custom_call.1} parent=1 // pred_fallthru
      _
    // Predicated region
    $region18: #{tpu_custom_call.1} parent=1 // pred_check
      _
    $region19: #{tpu_custom_call.1} parent=1 // pred_check_branch
      %35 = sbr.rel (0) target = $region21
    $region20: #{tpu_custom_call.1} parent=1 // pred_region
      %36 = dma.done [#allocation4], 2048
    $region21: #{tpu_custom_call.1} parent=1 // pred_fallthru
      _
    %v37 = vlaneseq
    %v38 = vand.u32 %v37, 127
    %v39 = vld [vmem:[%s0] sm:$0xff]
    %40 = vset.pattern.permute.xlu0 0
    %41 = vperm.xlu0 %40, %v39
    %v42 = vpop.permute.xlu0 %41
    %vm43 = vcmp.eq.s32.totalorder %v38, %v42
    %v44 = vsel %vm43, 1, 0
    %v45 = vcvt.s32.f32 %v44
    %v46 = vld [vmem:[#allocation3] sm:$0xff]
    %v47 = vld [vmem:[#allocation3 + $0x8] sm:$0xff]
    %v48 = vld [vmem:[#allocation3 + $0x10] sm:$0xff]
    %v49 = vld [vmem:[#allocation3 + $0x18] sm:$0xff]
    %v50 = vld [vmem:[#allocation3 + $0x20] sm:$0xff]
    %v51 = vld [vmem:[#allocation3 + $0x28] sm:$0xff]
    %v52 = vld [vmem:[#allocation3 + $0x30] sm:$0xff]
    %v53 = vld [vmem:[#allocation3 + $0x38] sm:$0xff]
    %v54 = vld [vmem:[#allocation3 + $0x40] sm:$0xff]
    %v55 = vld [vmem:[#allocation3 + $0x48] sm:$0xff]
    %v56 = vld [vmem:[#allocation3 + $0x50] sm:$0xff]
    %v57 = vld [vmem:[#allocation3 + $0x58] sm:$0xff]
    %v58 = vld [vmem:[#allocation3 + $0x60] sm:$0xff]
    %v59 = vld [vmem:[#allocation3 + $0x68] sm:$0xff]
    %v60 = vld [vmem:[#allocation3 + $0x70] sm:$0xff]
    %v61 = vld [vmem:[#allocation3 + $0x78] sm:$0xff]
    %vm62 = vcmask 523264
    %v64 = vsel %vm62, %v45, 0
    %v66 = vand.u32 %v47, 4294901760
    %67 = vmatprep.subr.mxu0 %v66
    %v68 = vand.u32 %v46, 4294901760
    %69 = vmatpush1.msra.mxu0 %v68
    %v70 = vand.u32 %v49, 4294901760
    %71 = vmatprep.subr.mxu0 %v70
    %v72 = vand.u32 %v48, 4294901760
    %73 = vmatpush1.msra.mxu0 %v72
    %v74 = vand.u32 %v51, 4294901760
    %75 = vmatprep.subr.mxu0 %v74
    %v76 = vand.u32 %v50, 4294901760
    %77 = vmatpush1.msra.mxu0 %v76
    %v78 = vand.u32 %v53, 4294901760
    %79 = vmatprep.subr.mxu0 %v78
    %v80 = vand.u32 %v52, 4294901760
    %81 = vmatpush1.msra.mxu0 %v80
    %v82 = vand.u32 %v55, 4294901760
    %83 = vmatprep.subr.mxu0 %v82
    %v84 = vand.u32 %v54, 4294901760
    %85 = vmatpush1.msra.mxu0 %v84
    %v86 = vand.u32 %v57, 4294901760
    %87 = vmatprep.subr.mxu0 %v86
    %v88 = vand.u32 %v56, 4294901760
    %89 = vmatpush1.msra.mxu0 %v88
    %v90 = vand.u32 %v59, 4294901760
    %91 = vmatprep.subr.mxu0 %v90
    %v92 = vand.u32 %v58, 4294901760
    %93 = vmatpush1.msra.mxu0 %v92
    %v94 = vand.u32 %v61, 4294901760
    %95 = vmatprep.subr.mxu0 %v94
    %v96 = vand.u32 %v60, 4294901760
    %97 = vmatpush1.msra.mxu0 %v96
    %98 = vmatprep.subr.mxu0 0.0
    %99 = vmatpush1.msra.mxu0 0.0
    %100 = vmatprep.subr.mxu0 0.0
    %101 = vmatpush1.msra.mxu0 0.0
    %102 = vmatprep.subr.mxu0 0.0
    %103 = vmatpush1.msra.mxu0 0.0
    %104 = vmatprep.subr.mxu0 0.0
    %105 = vmatpush1.msra.mxu0 0.0
    %106 = vmatprep.subr.mxu0 0.0
    %107 = vmatpush1.msra.mxu0 0.0
    %108 = vmatprep.subr.mxu0 0.0
    %109 = vmatpush1.msra.mxu0 0.0
    %110 = vmatprep.subr.mxu0 0.0
    %111 = vmatpush1.msra.mxu0 0.0
    %112 = vmatprep.subr.mxu0 0.0
    %113 = vmatpush1.msra.mxu0 0.0
    %114 = vmatprep.subr.mxu0 0.0
    %115 = vmatpush1.msra.mxu0 0.0
    %116 = vmatprep.subr.mxu0 0.0
    %117 = vmatpush1.msra.mxu0 0.0
    %118 = vmatprep.subr.mxu0 0.0
    %119 = vmatpush1.msra.mxu0 0.0
    %120 = vmatprep.subr.mxu0 0.0
    %121 = vmatpush1.msra.mxu0 0.0
    %122 = vmatprep.subr.mxu0 0.0
    %123 = vmatpush1.msra.mxu0 0.0
    %124 = vmatprep.subr.mxu0 0.0
    %125 = vmatpush1.msra.mxu0 0.0
    %126 = vmatprep.subr.mxu0 0.0
    %127 = vmatpush1.msra.mxu0 0.0
    %128 = vmatprep.subr.mxu0 0.0
    %129 = vmatpush1.msra.mxu0 0.0
    %130 = vmatprep.subr.mxu0 0.0
    %131 = vmatpush1.msra.mxu0 0.0
    %132 = vmatprep.subr.mxu0 0.0
    %133 = vmatpush1.msra.mxu0 0.0
    %134 = vmatprep.subr.mxu0 0.0
    %135 = vmatpush1.msra.mxu0 0.0
    %136 = vmatprep.subr.mxu0 0.0
    %137 = vmatpush1.msra.mxu0 0.0
    %138 = vmatprep.subr.mxu0 0.0
    %139 = vmatpush1.msra.mxu0 0.0
    %140 = vmatprep.subr.mxu0 0.0
    %141 = vmatpush1.msra.mxu0 0.0
    %142 = vmatprep.subr.mxu0 0.0
    %143 = vmatpush1.msra.mxu0 0.0
    %144 = vmatprep.subr.mxu0 0.0
    %145 = vmatpush1.msra.mxu0 0.0
    %146 = vmatprep.mubr.f32.mxu0 0.0
    %v147 = vand.u32 %v64, 4294901760
    %v148 = vsub.f32 %v64, %v147
    %v149 = vand.u32 %v148, 4294901760
    %v150 = vsub.f32 %v148, %v149
    %v151 = vand.u32 %v150, 4294901760
    %152 = vmatmul.mubr.f32.gmra.mrb[0].mxu0 %v151
    %v153 = vpop.f32.mrb[0].mxu0
    %v154 = vadd.f32 0.0, %v153
    %v155 = vpop.f32.mrb[0].mxu0
    %v156 = vadd.f32 0.0, %v155
    %157 = vdwg.mxu0
    %v158 = vand.u32 %v47, 4294901760
    %v159 = vsub.f32 %v47, %v158
    %v160 = vand.u32 %v159, 4294901760
    %v161 = vsub.f32 %v159, %v160
    %v162 = vand.u32 %v161, 4294901760
    %163 = vmatprep.subr.mxu0 %v162
    %v164 = vand.u32 %v46, 4294901760
    %v165 = vsub.f32 %v46, %v164
    %v166 = vand.u32 %v165, 4294901760
    %v167 = vsub.f32 %v165, %v166
    %v168 = vand.u32 %v167, 4294901760
    %169 = vmatpush1.msra.mxu0 %v168
    %v170 = vand.u32 %v49, 4294901760
    %v171 = vsub.f32 %v49, %v170
    %v172 = vand.u32 %v171, 4294901760
    %v173 = vsub.f32 %v171, %v172
    %v174 = vand.u32 %v173, 4294901760
    %175 = vmatprep.subr.mxu0 %v174
    %v176 = vand.u32 %v48, 4294901760
    %v177 = vsub.f32 %v48, %v176
    %v178 = vand.u32 %v177, 4294901760
    %v179 = vsub.f32 %v177, %v178
    %v180 = vand.u32 %v179, 4294901760
    %181 = vmatpush1.msra.mxu0 %v180
    %v182 = vand.u32 %v51, 4294901760
    %v183 = vsub.f32 %v51, %v182
    %v184 = vand.u32 %v183, 4294901760
    %v185 = vsub.f32 %v183, %v184
    %v186 = vand.u32 %v185, 4294901760
    %187 = vmatprep.subr.mxu0 %v186
    %v188 = vand.u32 %v50, 4294901760
    %v189 = vsub.f32 %v50, %v188
    %v190 = vand.u32 %v189, 4294901760
    %v191 = vsub.f32 %v189, %v190
    %v192 = vand.u32 %v191, 4294901760
    %193 = vmatpush1.msra.mxu0 %v192
    %v194 = vand.u32 %v53, 4294901760
    %v195 = vsub.f32 %v53, %v194
    %v196 = vand.u32 %v195, 4294901760
    %v197 = vsub.f32 %v195, %v196
    %v198 = vand.u32 %v197, 4294901760
    %199 = vmatprep.subr.mxu0 %v198
    %v200 = vand.u32 %v52, 4294901760
    %v201 = vsub.f32 %v52, %v200
    %v202 = vand.u32 %v201, 4294901760
    %v203 = vsub.f32 %v201, %v202
    %v204 = vand.u32 %v203, 4294901760
    %205 = vmatpush1.msra.mxu0 %v204
    %v206 = vand.u32 %v55, 4294901760
    %v207 = vsub.f32 %v55, %v206
    %v208 = vand.u32 %v207, 4294901760
    %v209 = vsub.f32 %v207, %v208
    %v210 = vand.u32 %v209, 4294901760
    %211 = vmatprep.subr.mxu0 %v210
    %v212 = vand.u32 %v54, 4294901760
    %v213 = vsub.f32 %v54, %v212
    %v214 = vand.u32 %v213, 4294901760
    %v215 = vsub.f32 %v213, %v214
    %v216 = vand.u32 %v215, 4294901760
    %217 = vmatpush1.msra.mxu0 %v216
    %v218 = vand.u32 %v57, 4294901760
    %v219 = vsub.f32 %v57, %v218
    %v220 = vand.u32 %v219, 4294901760
    %v221 = vsub.f32 %v219, %v220
    %v222 = vand.u32 %v221, 4294901760
    %223 = vmatprep.subr.mxu0 %v222
    %v224 = vand.u32 %v56, 4294901760
    %v225 = vsub.f32 %v56, %v224
    %v226 = vand.u32 %v225, 4294901760
    %v227 = vsub.f32 %v225, %v226
    %v228 = vand.u32 %v227, 4294901760
    %229 = vmatpush1.msra.mxu0 %v228
    %v230 = vand.u32 %v59, 4294901760
    %v231 = vsub.f32 %v59, %v230
    %v232 = vand.u32 %v231, 4294901760
    %v233 = vsub.f32 %v231, %v232
    %v234 = vand.u32 %v233, 4294901760
    %235 = vmatprep.subr.mxu0 %v234
    %v236 = vand.u32 %v58, 4294901760
    %v237 = vsub.f32 %v58, %v236
    %v238 = vand.u32 %v237, 4294901760
    %v239 = vsub.f32 %v237, %v238
    %v240 = vand.u32 %v239, 4294901760
    %241 = vmatpush1.msra.mxu0 %v240
    %v242 = vand.u32 %v61, 4294901760
    %v243 = vsub.f32 %v61, %v242
    %v244 = vand.u32 %v243, 4294901760
    %v245 = vsub.f32 %v243, %v244
    %v246 = vand.u32 %v245, 4294901760
    %247 = vmatprep.subr.mxu0 %v246
    %v248 = vand.u32 %v60, 4294901760
    %v249 = vsub.f32 %v60, %v248
    %v250 = vand.u32 %v249, 4294901760
    %v251 = vsub.f32 %v249, %v250
    %v252 = vand.u32 %v251, 4294901760
    %253 = vmatpush1.msra.mxu0 %v252
    %254 = vmatprep.subr.mxu0 0.0
    %255 = vmatpush1.msra.mxu0 0.0
    %256 = vmatprep.subr.mxu0 0.0
    %257 = vmatpush1.msra.mxu0 0.0
    %258 = vmatprep.subr.mxu0 0.0
    %259 = vmatpush1.msra.mxu0 0.0
    %260 = vmatprep.subr.mxu0 0.0
    %261 = vmatpush1.msra.mxu0 0.0
    %262 = vmatprep.subr.mxu0 0.0
    %263 = vmatpush1.msra.mxu0 0.0
    %264 = vmatprep.subr.mxu0 0.0
    %265 = vmatpush1.msra.mxu0 0.0
    %266 = vmatprep.subr.mxu0 0.0
    %267 = vmatpush1.msra.mxu0 0.0
    %268 = vmatprep.subr.mxu0 0.0
    %269 = vmatpush1.msra.mxu0 0.0
    %270 = vmatprep.subr.mxu0 0.0
    %271 = vmatpush1.msra.mxu0 0.0
    %272 = vmatprep.subr.mxu0 0.0
    %273 = vmatpush1.msra.mxu0 0.0
    %274 = vmatprep.subr.mxu0 0.0
    %275 = vmatpush1.msra.mxu0 0.0
    %276 = vmatprep.subr.mxu0 0.0
    %277 = vmatpush1.msra.mxu0 0.0
    %278 = vmatprep.subr.mxu0 0.0
    %279 = vmatpush1.msra.mxu0 0.0
    %280 = vmatprep.subr.mxu0 0.0
    %281 = vmatpush1.msra.mxu0 0.0
    %282 = vmatprep.subr.mxu0 0.0
    %283 = vmatpush1.msra.mxu0 0.0
    %284 = vmatprep.subr.mxu0 0.0
    %285 = vmatpush1.msra.mxu0 0.0
    %286 = vmatprep.subr.mxu0 0.0
    %287 = vmatpush1.msra.mxu0 0.0
    %288 = vmatprep.subr.mxu0 0.0
    %289 = vmatpush1.msra.mxu0 0.0
    %290 = vmatprep.subr.mxu0 0.0
    %291 = vmatpush1.msra.mxu0 0.0
    %292 = vmatprep.subr.mxu0 0.0
    %293 = vmatpush1.msra.mxu0 0.0
    %294 = vmatprep.subr.mxu0 0.0
    %295 = vmatpush1.msra.mxu0 0.0
    %296 = vmatprep.subr.mxu0 0.0
    %297 = vmatpush1.msra.mxu0 0.0
    %298 = vmatprep.subr.mxu0 0.0
    %299 = vmatpush1.msra.mxu0 0.0
    %300 = vmatprep.subr.mxu0 0.0
    %301 = vmatpush1.msra.mxu0 0.0
    %302 = vmatprep.mubr.f32.mxu0 0.0
    %v303 = vand.u32 %v64, 4294901760
    %304 = vmatmul.mubr.f32.gmra.mrb[0].mxu0 %v303
    %v305 = vpop.f32.mrb[0].mxu0
    %v306 = vadd.f32 %v154, %v305
    %v307 = vpop.f32.mrb[0].mxu0
    %v308 = vadd.f32 %v156, %v307
    %309 = vdwg.mxu0
    %v310 = vand.u32 %v47, 4294901760
    %v311 = vsub.f32 %v47, %v310
    %312 = vmatprep.subr.mxu0 %v311
    %v313 = vand.u32 %v46, 4294901760
    %v314 = vsub.f32 %v46, %v313
    %315 = vmatpush1.msra.mxu0 %v314
    %v316 = vand.u32 %v49, 4294901760
    %v317 = vsub.f32 %v49, %v316
    %318 = vmatprep.subr.mxu0 %v317
    %v319 = vand.u32 %v48, 4294901760
    %v320 = vsub.f32 %v48, %v319
    %321 = vmatpush1.msra.mxu0 %v320
    %v322 = vand.u32 %v51, 4294901760
    %v323 = vsub.f32 %v51, %v322
    %324 = vmatprep.subr.mxu0 %v323
    %v325 = vand.u32 %v50, 4294901760
    %v326 = vsub.f32 %v50, %v325
    %327 = vmatpush1.msra.mxu0 %v326
    %v328 = vand.u32 %v53, 4294901760
    %v329 = vsub.f32 %v53, %v328
    %330 = vmatprep.subr.mxu0 %v329
    %v331 = vand.u32 %v52, 4294901760
    %v332 = vsub.f32 %v52, %v331
    %333 = vmatpush1.msra.mxu0 %v332
    %v334 = vand.u32 %v55, 4294901760
    %v335 = vsub.f32 %v55, %v334
    %336 = vmatprep.subr.mxu0 %v335
    %v337 = vand.u32 %v54, 4294901760
    %v338 = vsub.f32 %v54, %v337
    %339 = vmatpush1.msra.mxu0 %v338
    %v340 = vand.u32 %v57, 4294901760
    %v341 = vsub.f32 %v57, %v340
    %342 = vmatprep.subr.mxu0 %v341
    %v343 = vand.u32 %v56, 4294901760
    %v344 = vsub.f32 %v56, %v343
    %345 = vmatpush1.msra.mxu0 %v344
    %v346 = vand.u32 %v59, 4294901760
    %v347 = vsub.f32 %v59, %v346
    %348 = vmatprep.subr.mxu0 %v347
    %v349 = vand.u32 %v58, 4294901760
    %v350 = vsub.f32 %v58, %v349
    %351 = vmatpush1.msra.mxu0 %v350
    %v352 = vand.u32 %v61, 4294901760
    %v353 = vsub.f32 %v61, %v352
    %354 = vmatprep.subr.mxu0 %v353
    %v355 = vand.u32 %v60, 4294901760
    %v356 = vsub.f32 %v60, %v355
    %357 = vmatpush1.msra.mxu0 %v356
    %358 = vmatprep.subr.mxu0 0.0
    %359 = vmatpush1.msra.mxu0 0.0
    %360 = vmatprep.subr.mxu0 0.0
    %361 = vmatpush1.msra.mxu0 0.0
    %362 = vmatprep.subr.mxu0 0.0
    %363 = vmatpush1.msra.mxu0 0.0
    %364 = vmatprep.subr.mxu0 0.0
    %365 = vmatpush1.msra.mxu0 0.0
    %366 = vmatprep.subr.mxu0 0.0
    %367 = vmatpush1.msra.mxu0 0.0
    %368 = vmatprep.subr.mxu0 0.0
    %369 = vmatpush1.msra.mxu0 0.0
    %370 = vmatprep.subr.mxu0 0.0
    %371 = vmatpush1.msra.mxu0 0.0
    %372 = vmatprep.subr.mxu0 0.0
    %373 = vmatpush1.msra.mxu0 0.0
    %374 = vmatprep.subr.mxu0 0.0
    %375 = vmatpush1.msra.mxu0 0.0
    %376 = vmatprep.subr.mxu0 0.0
    %377 = vmatpush1.msra.mxu0 0.0
    %378 = vmatprep.subr.mxu0 0.0
    %379 = vmatpush1.msra.mxu0 0.0
    %380 = vmatprep.subr.mxu0 0.0
    %381 = vmatpush1.msra.mxu0 0.0
    %382 = vmatprep.subr.mxu0 0.0
    %383 = vmatpush1.msra.mxu0 0.0
    %384 = vmatprep.subr.mxu0 0.0
    %385 = vmatpush1.msra.mxu0 0.0
    %386 = vmatprep.subr.mxu0 0.0
    %387 = vmatpush1.msra.mxu0 0.0
    %388 = vmatprep.subr.mxu0 0.0
    %389 = vmatpush1.msra.mxu0 0.0
    %390 = vmatprep.subr.mxu0 0.0
    %391 = vmatpush1.msra.mxu0 0.0
    %392 = vmatprep.subr.mxu0 0.0
    %393 = vmatpush1.msra.mxu0 0.0
    %394 = vmatprep.subr.mxu0 0.0
    %395 = vmatpush1.msra.mxu0 0.0
    %396 = vmatprep.subr.mxu0 0.0
    %397 = vmatpush1.msra.mxu0 0.0
    %398 = vmatprep.subr.mxu0 0.0
    %399 = vmatpush1.msra.mxu0 0.0
    %400 = vmatprep.subr.mxu0 0.0
    %401 = vmatpush1.msra.mxu0 0.0
    %402 = vmatprep.subr.mxu0 0.0
    %403 = vmatpush1.msra.mxu0 0.0
    %404 = vmatprep.subr.mxu0 0.0
    %405 = vmatpush1.msra.mxu0 0.0
    %406 = vmatprep.mubr.f32.mxu0 0.0
    %v407 = vand.u32 %v64, 4294901760
    %v408 = vsub.f32 %v64, %v407
    %409 = vmatmul.mubr.f32.gmra.mrb[0].mxu0 %v408
    %v410 = vpop.f32.mrb[0].mxu0
    %v411 = vadd.f32 %v306, %v410
    %v412 = vpop.f32.mrb[0].mxu0
    %v413 = vadd.f32 %v308, %v412
    %414 = vdwg.mxu0
    %v415 = vand.u32 %v47, 4294901760
    %416 = vmatprep.subr.mxu0 %v415
    %v417 = vand.u32 %v46, 4294901760
    %418 = vmatpush1.msra.mxu0 %v417
    %v419 = vand.u32 %v49, 4294901760
    %420 = vmatprep.subr.mxu0 %v419
    %v421 = vand.u32 %v48, 4294901760
    %422 = vmatpush1.msra.mxu0 %v421
    %v423 = vand.u32 %v51, 4294901760
    %424 = vmatprep.subr.mxu0 %v423
    %v425 = vand.u32 %v50, 4294901760
    %426 = vmatpush1.msra.mxu0 %v425
    %v427 = vand.u32 %v53, 4294901760
    %428 = vmatprep.subr.mxu0 %v427
    %v429 = vand.u32 %v52, 4294901760
    %430 = vmatpush1.msra.mxu0 %v429
    %v431 = vand.u32 %v55, 4294901760
    %432 = vmatprep.subr.mxu0 %v431
    %v433 = vand.u32 %v54, 4294901760
    %434 = vmatpush1.msra.mxu0 %v433
    %v435 = vand.u32 %v57, 4294901760
    %436 = vmatprep.subr.mxu0 %v435
    %v437 = vand.u32 %v56, 4294901760
    %438 = vmatpush1.msra.mxu0 %v437
    %v439 = vand.u32 %v59, 4294901760
    %440 = vmatprep.subr.mxu0 %v439
    %v441 = vand.u32 %v58, 4294901760
    %442 = vmatpush1.msra.mxu0 %v441
    %v443 = vand.u32 %v61, 4294901760
    %444 = vmatprep.subr.mxu0 %v443
    %v445 = vand.u32 %v60, 4294901760
    %446 = vmatpush1.msra.mxu0 %v445
    %447 = vmatprep.subr.mxu0 0.0
    %448 = vmatpush1.msra.mxu0 0.0
    %449 = vmatprep.subr.mxu0 0.0
    %450 = vmatpush1.msra.mxu0 0.0
    %451 = vmatprep.subr.mxu0 0.0
    %452 = vmatpush1.msra.mxu0 0.0
    %453 = vmatprep.subr.mxu0 0.0
    %454 = vmatpush1.msra.mxu0 0.0
    %455 = vmatprep.subr.mxu0 0.0
    %456 = vmatpush1.msra.mxu0 0.0
    %457 = vmatprep.subr.mxu0 0.0
    %458 = vmatpush1.msra.mxu0 0.0
    %459 = vmatprep.subr.mxu0 0.0
    %460 = vmatpush1.msra.mxu0 0.0
    %461 = vmatprep.subr.mxu0 0.0
    %462 = vmatpush1.msra.mxu0 0.0
    %463 = vmatprep.subr.mxu0 0.0
    %464 = vmatpush1.msra.mxu0 0.0
    %465 = vmatprep.subr.mxu0 0.0
    %466 = vmatpush1.msra.mxu0 0.0
    %467 = vmatprep.subr.mxu0 0.0
    %468 = vmatpush1.msra.mxu0 0.0
    %469 = vmatprep.subr.mxu0 0.0
    %470 = vmatpush1.msra.mxu0 0.0
    %471 = vmatprep.subr.mxu0 0.0
    %472 = vmatpush1.msra.mxu0 0.0
    %473 = vmatprep.subr.mxu0 0.0
    %474 = vmatpush1.msra.mxu0 0.0
    %475 = vmatprep.subr.mxu0 0.0
    %476 = vmatpush1.msra.mxu0 0.0
    %477 = vmatprep.subr.mxu0 0.0
    %478 = vmatpush1.msra.mxu0 0.0
    %479 = vmatprep.subr.mxu0 0.0
    %480 = vmatpush1.msra.mxu0 0.0
    %481 = vmatprep.subr.mxu0 0.0
    %482 = vmatpush1.msra.mxu0 0.0
    %483 = vmatprep.subr.mxu0 0.0
    %484 = vmatpush1.msra.mxu0 0.0
    %485 = vmatprep.subr.mxu0 0.0
    %486 = vmatpush1.msra.mxu0 0.0
    %487 = vmatprep.subr.mxu0 0.0
    %488 = vmatpush1.msra.mxu0 0.0
    %489 = vmatprep.subr.mxu0 0.0
    %490 = vmatpush1.msra.mxu0 0.0
    %491 = vmatprep.subr.mxu0 0.0
    %492 = vmatpush1.msra.mxu0 0.0
    %493 = vmatprep.subr.mxu0 0.0
    %494 = vmatpush1.msra.mxu0 0.0
    %495 = vmatprep.mubr.f32.mxu0 0.0
    %v496 = vand.u32 %v64, 4294901760
    %v497 = vsub.f32 %v64, %v496
    %v498 = vand.u32 %v497, 4294901760
    %499 = vmatmul.mubr.f32.gmra.mrb[0].mxu0 %v498
    %v500 = vpop.f32.mrb[0].mxu0
    %v501 = vadd.f32 %v411, %v500
    %v502 = vpop.f32.mrb[0].mxu0
    %v503 = vadd.f32 %v413, %v502
    %504 = vdwg.mxu0
    %v505 = vand.u32 %v47, 4294901760
    %v506 = vsub.f32 %v47, %v505
    %v507 = vand.u32 %v506, 4294901760
    %508 = vmatprep.subr.mxu0 %v507
    %v509 = vand.u32 %v46, 4294901760
    %v510 = vsub.f32 %v46, %v509
    %v511 = vand.u32 %v510, 4294901760
    %512 = vmatpush1.msra.mxu0 %v511
    %v513 = vand.u32 %v49, 4294901760
    %v514 = vsub.f32 %v49, %v513
    %v515 = vand.u32 %v514, 4294901760
    %516 = vmatprep.subr.mxu0 %v515
    %v517 = vand.u32 %v48, 4294901760
    %v518 = vsub.f32 %v48, %v517
    %v519 = vand.u32 %v518, 4294901760
    %520 = vmatpush1.msra.mxu0 %v519
    %v521 = vand.u32 %v51, 4294901760
    %v522 = vsub.f32 %v51, %v521
    %v523 = vand.u32 %v522, 4294901760
    %524 = vmatprep.subr.mxu0 %v523
    %v525 = vand.u32 %v50, 4294901760
    %v526 = vsub.f32 %v50, %v525
    %v527 = vand.u32 %v526, 4294901760
    %528 = vmatpush1.msra.mxu0 %v527
    %v529 = vand.u32 %v53, 4294901760
    %v530 = vsub.f32 %v53, %v529
    %v531 = vand.u32 %v530, 4294901760
    %532 = vmatprep.subr.mxu0 %v531
    %v533 = vand.u32 %v52, 4294901760
    %v534 = vsub.f32 %v52, %v533
    %v535 = vand.u32 %v534, 4294901760
    %536 = vmatpush1.msra.mxu0 %v535
    %v537 = vand.u32 %v55, 4294901760
    %v538 = vsub.f32 %v55, %v537
    %v539 = vand.u32 %v538, 4294901760
    %540 = vmatprep.subr.mxu0 %v539
    %v541 = vand.u32 %v54, 4294901760
    %v542 = vsub.f32 %v54, %v541
    %v543 = vand.u32 %v542, 4294901760
    %544 = vmatpush1.msra.mxu0 %v543
    %v545 = vand.u32 %v57, 4294901760
    %v546 = vsub.f32 %v57, %v545
    %v547 = vand.u32 %v546, 4294901760
    %548 = vmatprep.subr.mxu0 %v547
    %v549 = vand.u32 %v56, 4294901760
    %v550 = vsub.f32 %v56, %v549
    %v551 = vand.u32 %v550, 4294901760
    %552 = vmatpush1.msra.mxu0 %v551
    %v553 = vand.u32 %v59, 4294901760
    %v554 = vsub.f32 %v59, %v553
    %v555 = vand.u32 %v554, 4294901760
    %556 = vmatprep.subr.mxu0 %v555
    %v557 = vand.u32 %v58, 4294901760
    %v558 = vsub.f32 %v58, %v557
    %v559 = vand.u32 %v558, 4294901760
    %560 = vmatpush1.msra.mxu0 %v559
    %v561 = vand.u32 %v61, 4294901760
    %v562 = vsub.f32 %v61, %v561
    %v563 = vand.u32 %v562, 4294901760
    %564 = vmatprep.subr.mxu0 %v563
    %v565 = vand.u32 %v60, 4294901760
    %v566 = vsub.f32 %v60, %v565
    %v567 = vand.u32 %v566, 4294901760
    %568 = vmatpush1.msra.mxu0 %v567
    %569 = vmatprep.subr.mxu0 0.0
    %570 = vmatpush1.msra.mxu0 0.0
    %571 = vmatprep.subr.mxu0 0.0
    %572 = vmatpush1.msra.mxu0 0.0
    %573 = vmatprep.subr.mxu0 0.0
    %574 = vmatpush1.msra.mxu0 0.0
    %575 = vmatprep.subr.mxu0 0.0
    %576 = vmatpush1.msra.mxu0 0.0
    %577 = vmatprep.subr.mxu0 0.0
    %578 = vmatpush1.msra.mxu0 0.0
    %579 = vmatprep.subr.mxu0 0.0
    %580 = vmatpush1.msra.mxu0 0.0
    %581 = vmatprep.subr.mxu0 0.0
    %582 = vmatpush1.msra.mxu0 0.0
    %583 = vmatprep.subr.mxu0 0.0
    %584 = vmatpush1.msra.mxu0 0.0
    %585 = vmatprep.subr.mxu0 0.0
    %586 = vmatpush1.msra.mxu0 0.0
    %587 = vmatprep.subr.mxu0 0.0
    %588 = vmatpush1.msra.mxu0 0.0
    %589 = vmatprep.subr.mxu0 0.0
    %590 = vmatpush1.msra.mxu0 0.0
    %591 = vmatprep.subr.mxu0 0.0
    %592 = vmatpush1.msra.mxu0 0.0
    %593 = vmatprep.subr.mxu0 0.0
    %594 = vmatpush1.msra.mxu0 0.0
    %595 = vmatprep.subr.mxu0 0.0
    %596 = vmatpush1.msra.mxu0 0.0
    %597 = vmatprep.subr.mxu0 0.0
    %598 = vmatpush1.msra.mxu0 0.0
    %599 = vmatprep.subr.mxu0 0.0
    %600 = vmatpush1.msra.mxu0 0.0
    %601 = vmatprep.subr.mxu0 0.0
    %602 = vmatpush1.msra.mxu0 0.0
    %603 = vmatprep.subr.mxu0 0.0
    %604 = vmatpush1.msra.mxu0 0.0
    %605 = vmatprep.subr.mxu0 0.0
    %606 = vmatpush1.msra.mxu0 0.0
    %607 = vmatprep.subr.mxu0 0.0
    %608 = vmatpush1.msra.mxu0 0.0
    %609 = vmatprep.subr.mxu0 0.0
    %610 = vmatpush1.msra.mxu0 0.0
    %611 = vmatprep.subr.mxu0 0.0
    %612 = vmatpush1.msra.mxu0 0.0
    %613 = vmatprep.subr.mxu0 0.0
    %614 = vmatpush1.msra.mxu0 0.0
    %615 = vmatprep.subr.mxu0 0.0
    %616 = vmatpush1.msra.mxu0 0.0
    %617 = vmatprep.mubr.f32.mxu0 0.0
    %v618 = vand.u32 %v64, 4294901760
    %619 = vmatmul.mubr.f32.gmra.mrb[0].mxu0 %v618
    %v620 = vpop.f32.mrb[0].mxu0
    %v621 = vadd.f32 %v501, %v620
    %v622 = vpop.f32.mrb[0].mxu0
    %v623 = vadd.f32 %v503, %v622
    %624 = vdwg.mxu0
    %v625 = vand.u32 %v47, 4294901760
    %626 = vmatprep.subr.mxu0 %v625
    %v627 = vand.u32 %v46, 4294901760
    %628 = vmatpush1.msra.mxu0 %v627
    %v629 = vand.u32 %v49, 4294901760
    %630 = vmatprep.subr.mxu0 %v629
    %v631 = vand.u32 %v48, 4294901760
    %632 = vmatpush1.msra.mxu0 %v631
    %v633 = vand.u32 %v51, 4294901760
    %634 = vmatprep.subr.mxu0 %v633
    %v635 = vand.u32 %v50, 4294901760
    %636 = vmatpush1.msra.mxu0 %v635
    %v637 = vand.u32 %v53, 4294901760
    %638 = vmatprep.subr.mxu0 %v637
    %v639 = vand.u32 %v52, 4294901760
    %640 = vmatpush1.msra.mxu0 %v639
    %v641 = vand.u32 %v55, 4294901760
    %642 = vmatprep.subr.mxu0 %v641
    %v643 = vand.u32 %v54, 4294901760
    %644 = vmatpush1.msra.mxu0 %v643
    %v645 = vand.u32 %v57, 4294901760
    %646 = vmatprep.subr.mxu0 %v645
    %v647 = vand.u32 %v56, 4294901760
    %648 = vmatpush1.msra.mxu0 %v647
    %v649 = vand.u32 %v59, 4294901760
    %650 = vmatprep.subr.mxu0 %v649
    %v651 = vand.u32 %v58, 4294901760
    %652 = vmatpush1.msra.mxu0 %v651
    %v653 = vand.u32 %v61, 4294901760
    %654 = vmatprep.subr.mxu0 %v653
    %v655 = vand.u32 %v60, 4294901760
    %656 = vmatpush1.msra.mxu0 %v655
    %657 = vmatprep.subr.mxu0 0.0
    %658 = vmatpush1.msra.mxu0 0.0
    %659 = vmatprep.subr.mxu0 0.0
    %660 = vmatpush1.msra.mxu0 0.0
    %661 = vmatprep.subr.mxu0 0.0
    %662 = vmatpush1.msra.mxu0 0.0
    %663 = vmatprep.subr.mxu0 0.0
    %664 = vmatpush1.msra.mxu0 0.0
    %665 = vmatprep.subr.mxu0 0.0
    %666 = vmatpush1.msra.mxu0 0.0
    %667 = vmatprep.subr.mxu0 0.0
    %668 = vmatpush1.msra.mxu0 0.0
    %669 = vmatprep.subr.mxu0 0.0
    %670 = vmatpush1.msra.mxu0 0.0
    %671 = vmatprep.subr.mxu0 0.0
    %672 = vmatpush1.msra.mxu0 0.0
    %673 = vmatprep.subr.mxu0 0.0
    %674 = vmatpush1.msra.mxu0 0.0
    %675 = vmatprep.subr.mxu0 0.0
    %676 = vmatpush1.msra.mxu0 0.0
    %677 = vmatprep.subr.mxu0 0.0
    %678 = vmatpush1.msra.mxu0 0.0
    %679 = vmatprep.subr.mxu0 0.0
    %680 = vmatpush1.msra.mxu0 0.0
    %681 = vmatprep.subr.mxu0 0.0
    %682 = vmatpush1.msra.mxu0 0.0
    %683 = vmatprep.subr.mxu0 0.0
    %684 = vmatpush1.msra.mxu0 0.0
    %685 = vmatprep.subr.mxu0 0.0
    %686 = vmatpush1.msra.mxu0 0.0
    %687 = vmatprep.subr.mxu0 0.0
    %688 = vmatpush1.msra.mxu0 0.0
    %689 = vmatprep.subr.mxu0 0.0
    %690 = vmatpush1.msra.mxu0 0.0
    %691 = vmatprep.subr.mxu0 0.0
    %692 = vmatpush1.msra.mxu0 0.0
    %693 = vmatprep.subr.mxu0 0.0
    %694 = vmatpush1.msra.mxu0 0.0
    %695 = vmatprep.subr.mxu0 0.0
    %696 = vmatpush1.msra.mxu0 0.0
    %697 = vmatprep.subr.mxu0 0.0
    %698 = vmatpush1.msra.mxu0 0.0
    %699 = vmatprep.subr.mxu0 0.0
    %700 = vmatpush1.msra.mxu0 0.0
    %701 = vmatprep.subr.mxu0 0.0
    %702 = vmatpush1.msra.mxu0 0.0
    %703 = vmatprep.subr.mxu0 0.0
    %704 = vmatpush1.msra.mxu0 0.0
    %705 = vmatprep.mubr.f32.mxu0 0.0
    %v706 = vand.u32 %v64, 4294901760
    %707 = vmatmul.mubr.f32.gmra.mrb[0].mxu0 %v706
    %v708 = vpop.f32.mrb[0].mxu0
    %v709 = vadd.f32 %v621, %v708
    %v710 = vpop.f32.mrb[0].mxu0
    %v711 = vadd.f32 %v623, %v710
    %712 = vdwg.mxu0
    %713 = vst [vmem:[#allocation6] sm:$0xff] %v709
    %714 = vst [vmem:[#allocation7] sm:$0xff] %v711
    %v715 = vld [vmem:[%s2] sm:$0x3]
    %v717 = vlaneseq
    %v718 = vshrl.u32 %v717, 7
    %v719 = vsub.s32 0, %v718
    %v720 = vrot.slane %v715, %v719
    %v721 = vlaneseq
    %v722 = vshrl.u32 %v721, 7
    %v723 = vsub.s32 1, %v722
    %v724 = vrot.slane %v715, %v723
    %v727 = vmul.f32 %v709, %v720
    %v728 = vmul.f32 %v711, %v724
    %v729 = vadd.f32 %v727, %v728
    %730 = vadd.xlane.f32.xlu0 %v729
    %v731 = vpop.xlane.xlu0 %730
    %s732 = sld [smem:[#allocation2]]
    %v733 = vstv %s732
    %v734 = vadd.f32 %v731, %v733
    %v735 = vxor.u32 %v734, 2147483648
    %v736 = vmul.f32 %v735, 1.442695
    %v737 = vpow.pop %v736
    %v738 = vadd.f32 %v737, 1.0
    %v739 = vrcp.pop %v738
    %v740 = vmul.f32 1.0, %v739
    %vm741 = vcmask 7168
    %742 = vst.msk [vmem:[%s4] sm:$0xff] %vm741, %v740
    // Predicated region
    $region22: #{tpu_custom_call.1} parent=1 // pred_check
      _
    $region23: #{tpu_custom_call.1} parent=1 // pred_check_branch
      %744 = sbr.rel (0) target = $region25
    $region24: #{tpu_custom_call.1} parent=1 // pred_region
      _
    $region25: #{tpu_custom_call.1} parent=1 // pred_fallthru
      _
    // Predicated region
    $region26: #{tpu_custom_call.1} parent=1 // pred_check
      _
    $region27: #{tpu_custom_call.1} parent=1 // pred_check_branch
      %746 = sbr.rel (0) target = $region29
    $region28: #{tpu_custom_call.1} parent=1 // pred_region
      %s748 = ssub.s32 128, 128
      %749 = vsyncadd [#allocation5], %s748
      %s751 = sshll.u32 [#allocation6], 4
      %s752 = int_to_ptr.vmem [resolvable:$true] %s751
      %754 = dma.vmem_to_hbm [thread:$0]  %s752, 128, %s5, [#allocation5]
    $region29: #{tpu_custom_call.1} parent=1 // pred_fallthru
      _
    // Predicated region
    $region30: #{tpu_custom_call.1} parent=1 // pred_check
      _
    $region31: #{tpu_custom_call.1} parent=1 // pred_check_branch
      %756 = sbr.rel (0) target = $region33
    $region32: #{tpu_custom_call.1} parent=1 // pred_region
      %s758 = ssub.s32 128, 128
      %759 = vsyncadd [#allocation8], %s758
      %s761 = sshll.u32 [#allocation7], 4
      %s762 = int_to_ptr.vmem [resolvable:$true] %s761
      %764 = dma.vmem_to_hbm [thread:$0]  %s762, 128, %s6, [#allocation8]
    $region33: #{tpu_custom_call.1} parent=1 // pred_fallthru
      _
    // Predicated region
    $region34: #{tpu_custom_call.1} parent=1 // pred_check
      _
    $region35: #{tpu_custom_call.1} parent=1 // pred_check_branch
      %766 = sbr.rel (0) target = $region37
    $region36: #{tpu_custom_call.1} parent=1 // pred_region
      _
    $region37: #{tpu_custom_call.1} parent=1 // pred_fallthru
      _
    // Predicated region
    $region38: #{tpu_custom_call.1} parent=1 // pred_check
      _
    $region39: #{tpu_custom_call.1} parent=1 // pred_check_branch
      %768 = sbr.rel (0) target = $region41
    $region40: #{tpu_custom_call.1} parent=1 // pred_region
      %769 = dma.done [#allocation5], 128
    $region41: #{tpu_custom_call.1} parent=1 // pred_fallthru
      _
    // Predicated region
    $region42: #{tpu_custom_call.1} parent=1 // pred_check
      _
    $region43: #{tpu_custom_call.1} parent=1 // pred_check_branch
      %771 = sbr.rel (0) target = $region45
    $region44: #{tpu_custom_call.1} parent=1 // pred_region
      %772 = dma.done [#allocation8], 128
    $region45: #{tpu_custom_call.1} parent=1 // pred_fallthru
      _
    %773 = vsyncpa [#allocation4], 1
    %774 = vsyncpa [#allocation5], 1
    %775 = vsyncpa [#allocation8], 1

</llo_original>
